<compile_context>
chip_gen: v6e
topology: v6e:2x2x1
jax: 0.10.0
libtpu: 0.0.40
codegen_flags: <defaults>
</compile_context>

<pallas_src>
import functools

import jax
import jax.numpy as jnp
import numpy as np
from jax.experimental import pallas as pl
from jax.experimental.pallas import tpu as pltpu


def _round_up(n, m):
    return ((n + m - 1) // m) * m


def lstm_forecast_kernel(x_ref, w_ih_t_ref, w_hh_t_ref, bias_ref,
                         w_lin_t_ref, b_lin_ref, out_ref, *, seq_len, batch):
    """Single-layer LSTM recurrence + final Linear, fully resident in VMEM.

    x_ref:       (T*Bp, I)   time-major, batch padded to the f32 sublane tile (8)
    w_ih_t_ref:  (I, 4H)     pre-transposed input->hidden weights (gate order i,f,g,o)
    w_hh_t_ref:  (H, 4H)     pre-transposed hidden->hidden weights
    bias_ref:    (1, 4H)     b_ih + b_hh (folded in the wrapper)
    w_lin_t_ref: (H, O)      pre-transposed output-projection weight
    b_lin_ref:   (1, O)      output-projection bias
    out_ref:     (Bp, O)     forecast (padded batch rows are don't-care; wrapper slices)
    """
    H = w_hh_t_ref.shape[0]
    in_features = x_ref.shape[1]

    # --- Input projection for ALL timesteps, bias folded in -------------------
    # For tiny I a K<8 MXU contraction is a wasted systolic pass + FIFO latency;
    # do it on the VPU as an unrolled broadcasted outer product instead.
    if in_features <= 4:
        gates_x = bias_ref[...]                                   # (1, 4H)
        for i in range(in_features):
            gates_x = gates_x + x_ref[:, i:i + 1] * w_ih_t_ref[i:i + 1, :]
    else:
        gates_x = (jnp.dot(x_ref[...], w_ih_t_ref[...],
                           preferred_element_type=jnp.float32)
                   + bias_ref[...])                               # (T*Bp, 4H)

    w_hh_t = w_hh_t_ref[...]                                      # hoisted, (H, 4H)

    # Lane mask: sigmoid on i/f/o lanes, tanh on g lanes. Hoisted out of the loop.
    lane = jax.lax.broadcasted_iota(jnp.int32, (1, 4 * H), 1)
    sig_mask = jnp.logical_or(lane < 2 * H, lane >= 3 * H)

    h = jnp.zeros((batch, H), jnp.float32)
    c = jnp.zeros((batch, H), jnp.float32)

    # T is small & static -> fully unrolled recurrence: one MXU matmul per step.
    # Batch padded to 8 means every gates_x slice below is a whole (8,128) vreg.
    # TODO(synk): keep W_hh resident in the MXU across steps via
    # pltpu.matmul_push_rhs / matmul_acc_lhs / matmul_pop once the per-step
    # non-accumulating pop semantics are validated; jnp.dot re-streams the RHS.
    for t in range(seq_len):
        gates = (jnp.dot(h, w_hh_t, preferred_element_type=jnp.float32)
                 + gates_x[t * batch:(t + 1) * batch, :])         # (Bp, 4H)
        # Full-vreg-width EUP activations, one live full-width result per step.
        act = jnp.where(sig_mask, jax.nn.sigmoid(gates), jnp.tanh(gates))
        i_g = act[:, 0:H]
        f_g = act[:, H:2 * H]
        g_g = act[:, 2 * H:3 * H]
        o_g = act[:, 3 * H:4 * H]
        c = f_g * c + i_g * g_g
        h = o_g * jnp.tanh(c)

    # nn.Dropout in eval/inference mode is the identity.
    # TODO(synk): training-mode dropout (stochastic masking) intentionally not emulated.
    out_ref[...] = (jnp.dot(h, w_lin_t_ref[...],
                            preferred_element_type=jnp.float32)
                    + b_lin_ref[...])


def prepare_params(params):
    """One-time layout plumbing per parameter set (kept out of the per-call path)."""
    return {
        "w_ih_t": jnp.asarray(params["w_ih"].T, jnp.float32),     # (I, 4H)
        "w_hh_t": jnp.asarray(params["w_hh"].T, jnp.float32),     # (H, 4H)
        "w_lin_t": jnp.asarray(params["w_lin"].T, jnp.float32),   # (H, O)
        "bias": jnp.asarray(params["b_ih"] + params["b_hh"], jnp.float32),  # (1, 4H)
        "b_lin": jnp.asarray(params["b_lin"], jnp.float32),       # (1, O)
    }


@jax.jit
def timeseries_forward(x, prep):
    """x: (B, T, I) batch-first, like the PyTorch module. Returns (B, O)."""
    B, T, I = x.shape
    O = prep["w_lin_t"].shape[1]

    # Pad batch to the f32 sublane tile so per-step blocks / MXU LHS are vreg-aligned.
    Bp = max(8, _round_up(B, 8))
    x_pad = jnp.pad(x.astype(jnp.float32), ((0, Bp - B), (0, 0), (0, 0)))
    x2d = jnp.transpose(x_pad, (1, 0, 2)).reshape(T * Bp, I)      # time-major slab

    vmem = pl.BlockSpec(memory_space=pltpu.MemorySpace.VMEM)
    kernel = functools.partial(lstm_forecast_kernel, seq_len=T, batch=Bp)
    out = pl.pallas_call(
        kernel,
        out_shape=jax.ShapeDtypeStruct((Bp, O), jnp.float32),
        in_specs=[vmem] * 6,
        out_specs=vmem,
    )(x2d, prep["w_ih_t"], prep["w_hh_t"], prep["bias"],
      prep["w_lin_t"], prep["b_lin"])
    return out[:B]


def init_params(key, input_size, hidden_size, output_size):
    """Deterministic PyTorch-style init: U(-1/sqrt(H), 1/sqrt(H))."""
    ks = jax.random.split(key, 7)
    k = 1.0 / np.sqrt(hidden_size)
    u = lambda kk, shape: jax.random.uniform(kk, shape, jnp.float32, -k, k)
    return {
        "w_ih": u(ks[0], (4 * hidden_size, input_size)),
        "w_hh": u(ks[1], (4 * hidden_size, hidden_size)),
        "b_ih": u(ks[2], (1, 4 * hidden_size)),
        "b_hh": u(ks[3], (1, 4 * hidden_size)),
        "w_lin": u(ks[4], (output_size, hidden_size)),
        "b_lin": u(ks[5], (1, output_size)),
    }


def reference_forward(x, params):
    """Pure-JAX reference mirroring torch.nn.LSTM (num_layers=1) + Linear (eval mode)."""
    B, T, I = x.shape
    H = params["w_hh"].shape[1]
    h = jnp.zeros((B, H), jnp.float32)
    c = jnp.zeros((B, H), jnp.float32)
    bias = params["b_ih"] + params["b_hh"]
    for t in range(T):
        gates = x[:, t, :] @ params["w_ih"].T + h @ params["w_hh"].T + bias
        i_g = jax.nn.sigmoid(gates[:, 0:H])
        f_g = jax.nn.sigmoid(gates[:, H:2 * H])
        g_g = jnp.tanh(gates[:, 2 * H:3 * H])
        o_g = jax.nn.sigmoid(gates[:, 3 * H:4 * H])
        c = f_g * c + i_g * g_g
        h = o_g * jnp.tanh(c)
    return h @ params["w_lin"].T + params["b_lin"]


if __name__ == "__main__":
    # Small shapes consistent with the module: x is (batch, seq_len, input_size).
    B, T, I = 2, 8, 1
    H, O = 32, 5            # 4H = 128 -> gate tile spans one full vreg lane width

    key = jax.random.PRNGKey(0)
    kx, kp = jax.random.split(key)
    x = jax.random.normal(kx, (B, T, I), jnp.float32)
    params = init_params(kp, I, H, O)
    prep = prepare_params(params)   # one-time per parameter set

    out = timeseries_forward(x, prep)
    out = jax.block_until_ready(out)

    ref = reference_forward(x, params)
    np.testing.assert_allclose(np.asarray(out), np.asarray(ref), rtol=1e-5, atol=1e-5)
    assert out.shape == (B, O)
    print("KERNEL_OK")
</pallas_src>

<mosaic_0001>
module attributes {stable_mosaic.version = 11 : i64} {
  func.func @lstm_forecast_kernel(%arg0: memref<64x1xf32, #tpu.memory_space<vmem>>, %arg1: memref<1x128xf32, #tpu.memory_space<vmem>>, %arg2: memref<32x128xf32, #tpu.memory_space<vmem>>, %arg3: memref<1x128xf32, #tpu.memory_space<vmem>>, %arg4: memref<32x5xf32, #tpu.memory_space<vmem>>, %arg5: memref<1x5xf32, #tpu.memory_space<vmem>>, %arg6: memref<8x5xf32, #tpu.memory_space<vmem>>) attributes {dimension_semantics = [], scalar_prefetch = 0 : i64, scratch_operands = 0 : i64, tpu.core_type = #tpu.core_type<tc>} {
    %c0 = arith.constant 0 : index
    %c0_0 = arith.constant 0 : index
    %0 = vector.load %arg3[%c0, %c0_0] : memref<1x128xf32, #tpu.memory_space<vmem>>, vector<1x128xf32>
    %c0_1 = arith.constant 0 : index
    %c0_2 = arith.constant 0 : index
    %1 = vector.load %arg0[%c0_1, %c0_2] : memref<64x1xf32, #tpu.memory_space<vmem>>, vector<64x1xf32>
    %c0_3 = arith.constant 0 : index
    %c0_4 = arith.constant 0 : index
    %2 = vector.load %arg1[%c0_3, %c0_4] : memref<1x128xf32, #tpu.memory_space<vmem>>, vector<1x128xf32>
    %3 = vector.broadcast %1 : vector<64x1xf32> to vector<64x128xf32>
    %4 = vector.broadcast %2 : vector<1x128xf32> to vector<64x128xf32>
    %5 = arith.mulf %3, %4 : vector<64x128xf32>
    %6 = vector.broadcast %0 : vector<1x128xf32> to vector<64x128xf32>
    %7 = arith.addf %6, %5 : vector<64x128xf32>
    %c0_5 = arith.constant 0 : index
    %c0_6 = arith.constant 0 : index
    %8 = vector.load %arg2[%c0_5, %c0_6] : memref<32x128xf32, #tpu.memory_space<vmem>>, vector<32x128xf32>
    %9 = tpu.iota {dimensions = array<i32: 1>} : vector<1x128xi32>
    %c64_i32 = arith.constant 64 : i32
    %10 = vector.broadcast %c64_i32 : i32 to vector<1x128xi32>
    %11 = arith.cmpi slt, %9, %10 : vector<1x128xi32>
    %c96_i32 = arith.constant 96 : i32
    %12 = vector.broadcast %c96_i32 : i32 to vector<1x128xi32>
    %13 = arith.cmpi sge, %9, %12 : vector<1x128xi32>
    %14 = arith.ori %11, %13 : vector<1x128xi1>
    %cst = arith.constant 0.000000e+00 : f32
    %15 = vector.broadcast %cst : f32 to vector<8x32xf32>
    %cst_7 = arith.constant 0.000000e+00 : f32
    %16 = vector.broadcast %cst_7 : f32 to vector<8x32xf32>
    %cst_8 = arith.constant dense<0.000000e+00> : vector<8x128xf32>
    %17 = tpu.matmul %15, %8, %cst_8 {dimension_numbers = #tpu.dot_dimension_numbers<[1], [0], [0], [1], [0, 0, 1, 1], [], []>} : vector<8x32xf32>, vector<32x128xf32>, vector<8x128xf32> -> vector<8x128xf32>
    %18 = vector.extract_strided_slice %7 {offsets = [0, 0], sizes = [8, 128], strides = [1, 1]} : vector<64x128xf32> to vector<8x128xf32>
    %19 = arith.addf %17, %18 : vector<8x128xf32>
    %20 = arith.negf %19 : vector<8x128xf32>
    %21 = math.exp %20 : vector<8x128xf32>
    %cst_9 = arith.constant 1.000000e+00 : f32
    %22 = vector.broadcast %cst_9 : f32 to vector<8x128xf32>
    %23 = arith.addf %22, %21 : vector<8x128xf32>
    %24 = arith.divf %22, %23 : vector<8x128xf32>
    %25 = math.tanh %19 : vector<8x128xf32>
    %26 = vector.shape_cast %14 : vector<1x128xi1> to vector<1x128xi1>
    %27 = vector.broadcast %26 : vector<1x128xi1> to vector<8x128xi1>
    %28 = arith.select %27, %24, %25 : vector<8x128xi1>, vector<8x128xf32>
    %29 = vector.extract_strided_slice %28 {offsets = [0, 0], sizes = [8, 32], strides = [1, 1]} : vector<8x128xf32> to vector<8x32xf32>
    %30 = vector.extract_strided_slice %28 {offsets = [0, 32], sizes = [8, 32], strides = [1, 1]} : vector<8x128xf32> to vector<8x32xf32>
    %31 = vector.extract_strided_slice %28 {offsets = [0, 64], sizes = [8, 32], strides = [1, 1]} : vector<8x128xf32> to vector<8x32xf32>
    %32 = vector.extract_strided_slice %28 {offsets = [0, 96], sizes = [8, 32], strides = [1, 1]} : vector<8x128xf32> to vector<8x32xf32>
    %33 = arith.mulf %30, %16 : vector<8x32xf32>
    %34 = arith.mulf %29, %31 : vector<8x32xf32>
    %35 = arith.addf %33, %34 : vector<8x32xf32>
    %36 = math.tanh %35 : vector<8x32xf32>
    %37 = arith.mulf %32, %36 : vector<8x32xf32>
    %cst_10 = arith.constant dense<0.000000e+00> : vector<8x128xf32>
    %38 = tpu.matmul %37, %8, %cst_10 {dimension_numbers = #tpu.dot_dimension_numbers<[1], [0], [0], [1], [0, 0, 1, 1], [], []>} : vector<8x32xf32>, vector<32x128xf32>, vector<8x128xf32> -> vector<8x128xf32>
    %39 = vector.extract_strided_slice %7 {offsets = [8, 0], sizes = [8, 128], strides = [1, 1]} : vector<64x128xf32> to vector<8x128xf32>
    %40 = arith.addf %38, %39 : vector<8x128xf32>
    %41 = arith.negf %40 : vector<8x128xf32>
    %42 = math.exp %41 : vector<8x128xf32>
    %cst_11 = arith.constant 1.000000e+00 : f32
    %43 = vector.broadcast %cst_11 : f32 to vector<8x128xf32>
    %44 = arith.addf %43, %42 : vector<8x128xf32>
    %45 = arith.divf %43, %44 : vector<8x128xf32>
    %46 = math.tanh %40 : vector<8x128xf32>
    %47 = vector.shape_cast %14 : vector<1x128xi1> to vector<1x128xi1>
    %48 = vector.broadcast %47 : vector<1x128xi1> to vector<8x128xi1>
    %49 = arith.select %48, %45, %46 : vector<8x128xi1>, vector<8x128xf32>
    %50 = vector.extract_strided_slice %49 {offsets = [0, 0], sizes = [8, 32], strides = [1, 1]} : vector<8x128xf32> to vector<8x32xf32>
    %51 = vector.extract_strided_slice %49 {offsets = [0, 32], sizes = [8, 32], strides = [1, 1]} : vector<8x128xf32> to vector<8x32xf32>
    %52 = vector.extract_strided_slice %49 {offsets = [0, 64], sizes = [8, 32], strides = [1, 1]} : vector<8x128xf32> to vector<8x32xf32>
    %53 = vector.extract_strided_slice %49 {offsets = [0, 96], sizes = [8, 32], strides = [1, 1]} : vector<8x128xf32> to vector<8x32xf32>
    %54 = arith.mulf %51, %35 : vector<8x32xf32>
    %55 = arith.mulf %50, %52 : vector<8x32xf32>
    %56 = arith.addf %54, %55 : vector<8x32xf32>
    %57 = math.tanh %56 : vector<8x32xf32>
    %58 = arith.mulf %53, %57 : vector<8x32xf32>
    %cst_12 = arith.constant dense<0.000000e+00> : vector<8x128xf32>
    %59 = tpu.matmul %58, %8, %cst_12 {dimension_numbers = #tpu.dot_dimension_numbers<[1], [0], [0], [1], [0, 0, 1, 1], [], []>} : vector<8x32xf32>, vector<32x128xf32>, vector<8x128xf32> -> vector<8x128xf32>
    %60 = vector.extract_strided_slice %7 {offsets = [16, 0], sizes = [8, 128], strides = [1, 1]} : vector<64x128xf32> to vector<8x128xf32>
    %61 = arith.addf %59, %60 : vector<8x128xf32>
    %62 = arith.negf %61 : vector<8x128xf32>
    %63 = math.exp %62 : vector<8x128xf32>
    %cst_13 = arith.constant 1.000000e+00 : f32
    %64 = vector.broadcast %cst_13 : f32 to vector<8x128xf32>
    %65 = arith.addf %64, %63 : vector<8x128xf32>
    %66 = arith.divf %64, %65 : vector<8x128xf32>
    %67 = math.tanh %61 : vector<8x128xf32>
    %68 = vector.shape_cast %14 : vector<1x128xi1> to vector<1x128xi1>
    %69 = vector.broadcast %68 : vector<1x128xi1> to vector<8x128xi1>
    %70 = arith.select %69, %66, %67 : vector<8x128xi1>, vector<8x128xf32>
    %71 = vector.extract_strided_slice %70 {offsets = [0, 0], sizes = [8, 32], strides = [1, 1]} : vector<8x128xf32> to vector<8x32xf32>
    %72 = vector.extract_strided_slice %70 {offsets = [0, 32], sizes = [8, 32], strides = [1, 1]} : vector<8x128xf32> to vector<8x32xf32>
    %73 = vector.extract_strided_slice %70 {offsets = [0, 64], sizes = [8, 32], strides = [1, 1]} : vector<8x128xf32> to vector<8x32xf32>
    %74 = vector.extract_strided_slice %70 {offsets = [0, 96], sizes = [8, 32], strides = [1, 1]} : vector<8x128xf32> to vector<8x32xf32>
    %75 = arith.mulf %72, %56 : vector<8x32xf32>
    %76 = arith.mulf %71, %73 : vector<8x32xf32>
    %77 = arith.addf %75, %76 : vector<8x32xf32>
    %78 = math.tanh %77 : vector<8x32xf32>
    %79 = arith.mulf %74, %78 : vector<8x32xf32>
    %cst_14 = arith.constant dense<0.000000e+00> : vector<8x128xf32>
    %80 = tpu.matmul %79, %8, %cst_14 {dimension_numbers = #tpu.dot_dimension_numbers<[1], [0], [0], [1], [0, 0, 1, 1], [], []>} : vector<8x32xf32>, vector<32x128xf32>, vector<8x128xf32> -> vector<8x128xf32>
    %81 = vector.extract_strided_slice %7 {offsets = [24, 0], sizes = [8, 128], strides = [1, 1]} : vector<64x128xf32> to vector<8x128xf32>
    %82 = arith.addf %80, %81 : vector<8x128xf32>
    %83 = arith.negf %82 : vector<8x128xf32>
    %84 = math.exp %83 : vector<8x128xf32>
    %cst_15 = arith.constant 1.000000e+00 : f32
    %85 = vector.broadcast %cst_15 : f32 to vector<8x128xf32>
    %86 = arith.addf %85, %84 : vector<8x128xf32>
    %87 = arith.divf %85, %86 : vector<8x128xf32>
    %88 = math.tanh %82 : vector<8x128xf32>
    %89 = vector.shape_cast %14 : vector<1x128xi1> to vector<1x128xi1>
    %90 = vector.broadcast %89 : vector<1x128xi1> to vector<8x128xi1>
    %91 = arith.select %90, %87, %88 : vector<8x128xi1>, vector<8x128xf32>
    %92 = vector.extract_strided_slice %91 {offsets = [0, 0], sizes = [8, 32], strides = [1, 1]} : vector<8x128xf32> to vector<8x32xf32>
    %93 = vector.extract_strided_slice %91 {offsets = [0, 32], sizes = [8, 32], strides = [1, 1]} : vector<8x128xf32> to vector<8x32xf32>
    %94 = vector.extract_strided_slice %91 {offsets = [0, 64], sizes = [8, 32], strides = [1, 1]} : vector<8x128xf32> to vector<8x32xf32>
    %95 = vector.extract_strided_slice %91 {offsets = [0, 96], sizes = [8, 32], strides = [1, 1]} : vector<8x128xf32> to vector<8x32xf32>
    %96 = arith.mulf %93, %77 : vector<8x32xf32>
    %97 = arith.mulf %92, %94 : vector<8x32xf32>
    %98 = arith.addf %96, %97 : vector<8x32xf32>
    %99 = math.tanh %98 : vector<8x32xf32>
    %100 = arith.mulf %95, %99 : vector<8x32xf32>
    %cst_16 = arith.constant dense<0.000000e+00> : vector<8x128xf32>
    %101 = tpu.matmul %100, %8, %cst_16 {dimension_numbers = #tpu.dot_dimension_numbers<[1], [0], [0], [1], [0, 0, 1, 1], [], []>} : vector<8x32xf32>, vector<32x128xf32>, vector<8x128xf32> -> vector<8x128xf32>
    %102 = vector.extract_strided_slice %7 {offsets = [32, 0], sizes = [8, 128], strides = [1, 1]} : vector<64x128xf32> to vector<8x128xf32>
    %103 = arith.addf %101, %102 : vector<8x128xf32>
    %104 = arith.negf %103 : vector<8x128xf32>
    %105 = math.exp %104 : vector<8x128xf32>
    %cst_17 = arith.constant 1.000000e+00 : f32
    %106 = vector.broadcast %cst_17 : f32 to vector<8x128xf32>
    %107 = arith.addf %106, %105 : vector<8x128xf32>
    %108 = arith.divf %106, %107 : vector<8x128xf32>
    %109 = math.tanh %103 : vector<8x128xf32>
    %110 = vector.shape_cast %14 : vector<1x128xi1> to vector<1x128xi1>
    %111 = vector.broadcast %110 : vector<1x128xi1> to vector<8x128xi1>
    %112 = arith.select %111, %108, %109 : vector<8x128xi1>, vector<8x128xf32>
    %113 = vector.extract_strided_slice %112 {offsets = [0, 0], sizes = [8, 32], strides = [1, 1]} : vector<8x128xf32> to vector<8x32xf32>
    %114 = vector.extract_strided_slice %112 {offsets = [0, 32], sizes = [8, 32], strides = [1, 1]} : vector<8x128xf32> to vector<8x32xf32>
    %115 = vector.extract_strided_slice %112 {offsets = [0, 64], sizes = [8, 32], strides = [1, 1]} : vector<8x128xf32> to vector<8x32xf32>
    %116 = vector.extract_strided_slice %112 {offsets = [0, 96], sizes = [8, 32], strides = [1, 1]} : vector<8x128xf32> to vector<8x32xf32>
    %117 = arith.mulf %114, %98 : vector<8x32xf32>
    %118 = arith.mulf %113, %115 : vector<8x32xf32>
    %119 = arith.addf %117, %118 : vector<8x32xf32>
    %120 = math.tanh %119 : vector<8x32xf32>
    %121 = arith.mulf %116, %120 : vector<8x32xf32>
    %cst_18 = arith.constant dense<0.000000e+00> : vector<8x128xf32>
    %122 = tpu.matmul %121, %8, %cst_18 {dimension_numbers = #tpu.dot_dimension_numbers<[1], [0], [0], [1], [0, 0, 1, 1], [], []>} : vector<8x32xf32>, vector<32x128xf32>, vector<8x128xf32> -> vector<8x128xf32>
    %123 = vector.extract_strided_slice %7 {offsets = [40, 0], sizes = [8, 128], strides = [1, 1]} : vector<64x128xf32> to vector<8x128xf32>
    %124 = arith.addf %122, %123 : vector<8x128xf32>
    %125 = arith.negf %124 : vector<8x128xf32>
    %126 = math.exp %125 : vector<8x128xf32>
    %cst_19 = arith.constant 1.000000e+00 : f32
    %127 = vector.broadcast %cst_19 : f32 to vector<8x128xf32>
    %128 = arith.addf %127, %126 : vector<8x128xf32>
    %129 = arith.divf %127, %128 : vector<8x128xf32>
    %130 = math.tanh %124 : vector<8x128xf32>
    %131 = vector.shape_cast %14 : vector<1x128xi1> to vector<1x128xi1>
    %132 = vector.broadcast %131 : vector<1x128xi1> to vector<8x128xi1>
    %133 = arith.select %132, %129, %130 : vector<8x128xi1>, vector<8x128xf32>
    %134 = vector.extract_strided_slice %133 {offsets = [0, 0], sizes = [8, 32], strides = [1, 1]} : vector<8x128xf32> to vector<8x32xf32>
    %135 = vector.extract_strided_slice %133 {offsets = [0, 32], sizes = [8, 32], strides = [1, 1]} : vector<8x128xf32> to vector<8x32xf32>
    %136 = vector.extract_strided_slice %133 {offsets = [0, 64], sizes = [8, 32], strides = [1, 1]} : vector<8x128xf32> to vector<8x32xf32>
    %137 = vector.extract_strided_slice %133 {offsets = [0, 96], sizes = [8, 32], strides = [1, 1]} : vector<8x128xf32> to vector<8x32xf32>
    %138 = arith.mulf %135, %119 : vector<8x32xf32>
    %139 = arith.mulf %134, %136 : vector<8x32xf32>
    %140 = arith.addf %138, %139 : vector<8x32xf32>
    %141 = math.tanh %140 : vector<8x32xf32>
    %142 = arith.mulf %137, %141 : vector<8x32xf32>
    %cst_20 = arith.constant dense<0.000000e+00> : vector<8x128xf32>
    %143 = tpu.matmul %142, %8, %cst_20 {dimension_numbers = #tpu.dot_dimension_numbers<[1], [0], [0], [1], [0, 0, 1, 1], [], []>} : vector<8x32xf32>, vector<32x128xf32>, vector<8x128xf32> -> vector<8x128xf32>
    %144 = vector.extract_strided_slice %7 {offsets = [48, 0], sizes = [8, 128], strides = [1, 1]} : vector<64x128xf32> to vector<8x128xf32>
    %145 = arith.addf %143, %144 : vector<8x128xf32>
    %146 = arith.negf %145 : vector<8x128xf32>
    %147 = math.exp %146 : vector<8x128xf32>
    %cst_21 = arith.constant 1.000000e+00 : f32
    %148 = vector.broadcast %cst_21 : f32 to vector<8x128xf32>
    %149 = arith.addf %148, %147 : vector<8x128xf32>
    %150 = arith.divf %148, %149 : vector<8x128xf32>
    %151 = math.tanh %145 : vector<8x128xf32>
    %152 = vector.shape_cast %14 : vector<1x128xi1> to vector<1x128xi1>
    %153 = vector.broadcast %152 : vector<1x128xi1> to vector<8x128xi1>
    %154 = arith.select %153, %150, %151 : vector<8x128xi1>, vector<8x128xf32>
    %155 = vector.extract_strided_slice %154 {offsets = [0, 0], sizes = [8, 32], strides = [1, 1]} : vector<8x128xf32> to vector<8x32xf32>
    %156 = vector.extract_strided_slice %154 {offsets = [0, 32], sizes = [8, 32], strides = [1, 1]} : vector<8x128xf32> to vector<8x32xf32>
    %157 = vector.extract_strided_slice %154 {offsets = [0, 64], sizes = [8, 32], strides = [1, 1]} : vector<8x128xf32> to vector<8x32xf32>
    %158 = vector.extract_strided_slice %154 {offsets = [0, 96], sizes = [8, 32], strides = [1, 1]} : vector<8x128xf32> to vector<8x32xf32>
    %159 = arith.mulf %156, %140 : vector<8x32xf32>
    %160 = arith.mulf %155, %157 : vector<8x32xf32>
    %161 = arith.addf %159, %160 : vector<8x32xf32>
    %162 = math.tanh %161 : vector<8x32xf32>
    %163 = arith.mulf %158, %162 : vector<8x32xf32>
    %cst_22 = arith.constant dense<0.000000e+00> : vector<8x128xf32>
    %164 = tpu.matmul %163, %8, %cst_22 {dimension_numbers = #tpu.dot_dimension_numbers<[1], [0], [0], [1], [0, 0, 1, 1], [], []>} : vector<8x32xf32>, vector<32x128xf32>, vector<8x128xf32> -> vector<8x128xf32>
    %165 = vector.extract_strided_slice %7 {offsets = [56, 0], sizes = [8, 128], strides = [1, 1]} : vector<64x128xf32> to vector<8x128xf32>
    %166 = arith.addf %164, %165 : vector<8x128xf32>
    %167 = arith.negf %166 : vector<8x128xf32>
    %168 = math.exp %167 : vector<8x128xf32>
    %cst_23 = arith.constant 1.000000e+00 : f32
    %169 = vector.broadcast %cst_23 : f32 to vector<8x128xf32>
    %170 = arith.addf %169, %168 : vector<8x128xf32>
    %171 = arith.divf %169, %170 : vector<8x128xf32>
    %172 = math.tanh %166 : vector<8x128xf32>
    %173 = vector.shape_cast %14 : vector<1x128xi1> to vector<1x128xi1>
    %174 = vector.broadcast %173 : vector<1x128xi1> to vector<8x128xi1>
    %175 = arith.select %174, %171, %172 : vector<8x128xi1>, vector<8x128xf32>
    %176 = vector.extract_strided_slice %175 {offsets = [0, 0], sizes = [8, 32], strides = [1, 1]} : vector<8x128xf32> to vector<8x32xf32>
    %177 = vector.extract_strided_slice %175 {offsets = [0, 32], sizes = [8, 32], strides = [1, 1]} : vector<8x128xf32> to vector<8x32xf32>
    %178 = vector.extract_strided_slice %175 {offsets = [0, 64], sizes = [8, 32], strides = [1, 1]} : vector<8x128xf32> to vector<8x32xf32>
    %179 = vector.extract_strided_slice %175 {offsets = [0, 96], sizes = [8, 32], strides = [1, 1]} : vector<8x128xf32> to vector<8x32xf32>
    %180 = arith.mulf %177, %161 : vector<8x32xf32>
    %181 = arith.mulf %176, %178 : vector<8x32xf32>
    %182 = arith.addf %180, %181 : vector<8x32xf32>
    %183 = math.tanh %182 : vector<8x32xf32>
    %184 = arith.mulf %179, %183 : vector<8x32xf32>
    %c0_24 = arith.constant 0 : index
    %c0_25 = arith.constant 0 : index
    %185 = vector.load %arg4[%c0_24, %c0_25] : memref<32x5xf32, #tpu.memory_space<vmem>>, vector<32x5xf32>
    %cst_26 = arith.constant dense<0.000000e+00> : vector<8x5xf32>
    %186 = tpu.matmul %184, %185, %cst_26 {dimension_numbers = #tpu.dot_dimension_numbers<[1], [0], [0], [1], [0, 0, 1, 1], [], []>} : vector<8x32xf32>, vector<32x5xf32>, vector<8x5xf32> -> vector<8x5xf32>
    %c0_27 = arith.constant 0 : index
    %c0_28 = arith.constant 0 : index
    %187 = vector.load %arg5[%c0_27, %c0_28] : memref<1x5xf32, #tpu.memory_space<vmem>>, vector<1x5xf32>
    %188 = vector.broadcast %187 : vector<1x5xf32> to vector<8x5xf32>
    %189 = arith.addf %186, %188 : vector<8x5xf32>
    %c0_29 = arith.constant 0 : index
    %c0_30 = arith.constant 0 : index
    %190 = vector.load %arg6[%c0_29, %c0_30] : memref<8x5xf32, #tpu.memory_space<vmem>>, vector<8x5xf32>
    tpu.vector_store %arg6[%c0_29, %c0_30], %189 {strides = array<i32>} : memref<8x5xf32, #tpu.memory_space<vmem>>, vector<8x5xf32>,
    return
  }
}

</mosaic_0001>

<llo_original>
// kernel: timeseries_forward.1
$region0: #{timeseries_forward.1}
  #allocation0 [shape = 'u32[]', space=smem, size = 0x4, offset = 0x4, fixed_abs, tag = 'smem constant byte address 0x4 - core index']
  #allocation1 [shape = 'u32[144,128]{1,0:T(1,128)}', space=vmem, size = 0x12000, scoped, tag = 'internal scratch']
  %s0 = inlined_call_operand.vmem [shape: f32[64,1], index: 0, kind: input, shape index: {}]
  %s1 = inlined_call_operand.vmem [shape: f32[1,128], index: 1, kind: input, shape index: {}]
  %s2 = inlined_call_operand.vmem [shape: f32[32,128], index: 2, kind: input, shape index: {}]
  %s3 = inlined_call_operand.vmem [shape: f32[1,128], index: 3, kind: input, shape index: {}]
  %s4 = inlined_call_operand.vmem [shape: f32[32,5], index: 4, kind: input, shape index: {}]
  %s5 = inlined_call_operand.vmem [shape: f32[1,5], index: 5, kind: input, shape index: {}]
  %s6 = inlined_call_operand.vmem [shape: f32[8,5], index: 6, kind: output, shape index: {}]
  %s7 = sld [smem:[#allocation0]]
  $region34: #{timeseries_forward.1} parent=0
    _
  %s9 = ssub.s32 1, %s7
  %s10 = scalar_select 0, %s9, %s7
  // Predicated region
  $region2: #{timeseries_forward.1} parent=0 // pred_check
    _
  $region3: #{timeseries_forward.1} parent=0 // pred_check_branch
    %12 = sbr.rel (0) target = $region5
  $region4: #{timeseries_forward.1} parent=0 // pred_region
    _
  $region5: #{timeseries_forward.1} parent=0 // pred_fallthru
    _
  // Predicated region
  $region6: #{timeseries_forward.1} parent=0 // pred_check
    _
  $region7: #{timeseries_forward.1} parent=0 // pred_check_branch
    %14 = sbr.rel (0) target = $region9
  $region8: #{timeseries_forward.1} parent=0 // pred_region
    _
  $region9: #{timeseries_forward.1} parent=0 // pred_fallthru
    _
  // Predicated region
  $region10: #{timeseries_forward.1} parent=0 // pred_check
    _
  $region11: #{timeseries_forward.1} parent=0 // pred_check_branch
    %16 = sbr.rel (0) target = $region13
  $region12: #{timeseries_forward.1} parent=0 // pred_region
    _
  $region13: #{timeseries_forward.1} parent=0 // pred_fallthru
    _
  // Predicated region
  $region14: #{timeseries_forward.1} parent=0 // pred_check
    _
  $region15: #{timeseries_forward.1} parent=0 // pred_check_branch
    %18 = sbr.rel (0) target = $region17
  $region16: #{timeseries_forward.1} parent=0 // pred_region
    _
  $region17: #{timeseries_forward.1} parent=0 // pred_fallthru
    _
  // Predicated region
  $region18: #{timeseries_forward.1} parent=0 // pred_check
    _
  $region19: #{timeseries_forward.1} parent=0 // pred_check_branch
    %20 = sbr.rel (0) target = $region21
  $region20: #{timeseries_forward.1} parent=0 // pred_region
    _
  $region21: #{timeseries_forward.1} parent=0 // pred_fallthru
    _
  // Predicated region
  $region22: #{timeseries_forward.1} parent=0 // pred_check
    _
  $region23: #{timeseries_forward.1} parent=0 // pred_check_branch
    %22 = sbr.rel (0) target = $region25
  $region24: #{timeseries_forward.1} parent=0 // pred_region
    _
  $region25: #{timeseries_forward.1} parent=0 // pred_fallthru
    _
  %v23 = vld [vmem:[%s3] sm:$0x1]
  %v24 = vld [vmem:[%s0] sm:$0xff]
  %v25 = vld [vmem:[%s0 + $0x8] sm:$0xff]
  %v26 = vld [vmem:[%s0 + $0x10] sm:$0xff]
  %v27 = vld [vmem:[%s0 + $0x18] sm:$0xff]
  %v28 = vld [vmem:[%s0 + $0x20] sm:$0xff]
  %v29 = vld [vmem:[%s0 + $0x28] sm:$0xff]
  %v30 = vld [vmem:[%s0 + $0x30] sm:$0xff]
  %v31 = vld [vmem:[%s0 + $0x38] sm:$0xff]
  %v32 = vld [vmem:[%s1] sm:$0x1]
  %34 = vset.pattern.permute.xlu0 0
  %35 = vperm.xlu0 %34, %v24
  %v36 = vpop.permute.xlu0 %35
  %39 = vset.pattern.permute.xlu0 0
  %40 = vperm.xlu0 %39, %v25
  %v41 = vpop.permute.xlu0 %40
  %44 = vset.pattern.permute.xlu0 0
  %45 = vperm.xlu0 %44, %v26
  %v46 = vpop.permute.xlu0 %45
  %49 = vset.pattern.permute.xlu0 0
  %50 = vperm.xlu0 %49, %v27
  %v51 = vpop.permute.xlu0 %50
  %54 = vset.pattern.permute.xlu0 0
  %55 = vperm.xlu0 %54, %v28
  %v56 = vpop.permute.xlu0 %55
  %59 = vset.pattern.permute.xlu0 0
  %60 = vperm.xlu0 %59, %v29
  %v61 = vpop.permute.xlu0 %60
  %64 = vset.pattern.permute.xlu0 0
  %65 = vperm.xlu0 %64, %v30
  %v66 = vpop.permute.xlu0 %65
  %69 = vset.pattern.permute.xlu0 0
  %70 = vperm.xlu0 %69, %v31
  %v71 = vpop.permute.xlu0 %70
  %v74 = vlaneseq
  %v75 = vshrl.u32 %v74, 7
  %v76 = vsub.s32 0, %v75
  %v77 = vrot.slane %v32, %v76
  %v79 = vmul.f32 %v36, %v77
  %v80 = vmul.f32 %v41, %v77
  %v81 = vmul.f32 %v46, %v77
  %v82 = vmul.f32 %v51, %v77
  %v83 = vmul.f32 %v56, %v77
  %v84 = vmul.f32 %v61, %v77
  %v85 = vmul.f32 %v66, %v77
  %v86 = vmul.f32 %v71, %v77
  %v88 = vlaneseq
  %v89 = vshrl.u32 %v88, 7
  %v90 = vsub.s32 0, %v89
  %v91 = vrot.slane %v23, %v90
  %v93 = vadd.f32 %v91, %v79
  %v94 = vadd.f32 %v91, %v80
  %v95 = vadd.f32 %v91, %v81
  %v96 = vadd.f32 %v91, %v82
  %v97 = vadd.f32 %v91, %v83
  %v98 = vadd.f32 %v91, %v84
  %v99 = vadd.f32 %v91, %v85
  %v100 = vadd.f32 %v91, %v86
  %v101 = vld [vmem:[%s2] sm:$0xff]
  %v102 = vld [vmem:[%s2 + $0x8] sm:$0xff]
  %v103 = vld [vmem:[%s2 + $0x10] sm:$0xff]
  %v104 = vld [vmem:[%s2 + $0x18] sm:$0xff]
  %v105 = vlaneseq
  %v106 = vand.u32 %v105, 127
  %vm107 = vcmp.lt.s32.totalorder %v106, 64
  %vm108 = vcmp.ge.s32.totalorder %v106, 96
  %vm109 = vmor %vm107, %vm108
  %vm110 = vcmask 261120
  %v112 = vsel %vm110, 0.0, 0
  %114 = vmatprep.subr.mxu0 0.0
  %115 = vmatpush1.msra.mxu0 0.0
  %116 = vmatprep.subr.mxu0 0.0
  %117 = vmatpush1.msra.mxu0 0.0
  %118 = vmatprep.subr.mxu0 0.0
  %119 = vmatpush1.msra.mxu0 0.0
  %120 = vmatprep.subr.mxu0 0.0
  %121 = vmatpush1.msra.mxu0 0.0
  %122 = vmatprep.subr.mxu0 0.0
  %123 = vmatpush1.msra.mxu0 0.0
  %124 = vmatprep.subr.mxu0 0.0
  %125 = vmatpush1.msra.mxu0 0.0
  %126 = vmatprep.subr.mxu0 0.0
  %127 = vmatpush1.msra.mxu0 0.0
  %128 = vmatprep.subr.mxu0 0.0
  %129 = vmatpush1.msra.mxu0 0.0
  %130 = vmatprep.subr.mxu0 0.0
  %131 = vmatpush1.msra.mxu0 0.0
  %132 = vmatprep.subr.mxu0 0.0
  %133 = vmatpush1.msra.mxu0 0.0
  %134 = vmatprep.subr.mxu0 0.0
  %135 = vmatpush1.msra.mxu0 0.0
  %136 = vmatprep.subr.mxu0 0.0
  %137 = vmatpush1.msra.mxu0 0.0
  %138 = vmatprep.subr.mxu0 0.0
  %139 = vmatpush1.msra.mxu0 %v104
  %140 = vmatprep.subr.mxu0 0.0
  %141 = vmatpush1.msra.mxu0 %v103
  %142 = vmatprep.subr.mxu0 0.0
  %143 = vmatpush1.msra.mxu0 %v102
  %144 = vmatprep.subr.mxu0 0.0
  %145 = vmatpush1.msra.mxu0 %v101
  %146 = vmatprep.subr.mxu0 0.0
  %147 = vmatpush2.msra.mxu0 0.0
  %148 = vmatprep.subr.mxu0 0.0
  %149 = vmatpush2.msra.mxu0 0.0
  %150 = vmatprep.subr.mxu0 0.0
  %151 = vmatpush2.msra.mxu0 0.0
  %152 = vmatprep.subr.mxu0 0.0
  %153 = vmatpush2.msra.mxu0 0.0
  %154 = vmatprep.subr.mxu0 0.0
  %155 = vmatpush2.msra.mxu0 0.0
  %156 = vmatprep.subr.mxu0 0.0
  %157 = vmatpush2.msra.mxu0 0.0
  %158 = vmatprep.subr.mxu0 0.0
  %159 = vmatpush2.msra.mxu0 0.0
  %160 = vmatprep.subr.mxu0 0.0
  %161 = vmatpush2.msra.mxu0 0.0
  %162 = vmatprep.subr.mxu0 0.0
  %163 = vmatpush2.msra.mxu0 0.0
  %164 = vmatprep.subr.mxu0 0.0
  %165 = vmatpush2.msra.mxu0 0.0
  %166 = vmatprep.subr.mxu0 0.0
  %167 = vmatpush2.msra.mxu0 0.0
  %168 = vmatprep.subr.mxu0 0.0
  %169 = vmatpush2.msra.mxu0 0.0
  %170 = vmatprep.subr.mxu0 0.0
  %171 = vmatpush2.msra.mxu0 0.0
  %172 = vmatprep.subr.mxu0 0.0
  %173 = vmatpush2.msra.mxu0 0.0
  %174 = vmatprep.subr.mxu0 0.0
  %175 = vmatpush2.msra.mxu0 0.0
  %176 = vmatprep.subr.mxu0 0.0
  %177 = vmatpush2.msra.mxu0 0.0
  %178 = vmatprep.mubr.f32.mxu0 0.0
  %179 = vmatmul.mubr.f32.gmra.mxu0 %v112
  %v180 = vpop.f32.mrf.mxu0
  %v181 = vadd.f32 %v93, %v180
  %v182 = vpop.f32.mrf.mxu0
  %183 = vdwg.mxu0
  %v184 = vxor.u32 %v181, 2147483648
  %v185 = vmul.f32 %v184, 1.442695
  %v186 = vpow.pop %v185
  %v187 = vadd.f32 %v186, 1.0
  %v188 = vrcp.pop %v187
  %v189 = vmul.f32 1.0, %v188
  %v190 = vtanh.pop %v181
  %v191 = vsel %vm109, 1, 0
  %vm192 = vcmp.eq.s32.totalorder %v191, 1
  %v193 = vsel %vm192, %v189, %v190
  %v194 = vmul.f32 %v193, 0.0
  %196 = vrot.lane.b32.xlu0 %v193, 64
  %v197 = vpop.permute.xlu0 %196
  %v199 = vmul.f32 %v193, %v197
  %201 = vrot.lane.b32.xlu0 %v199, 32
  %v202 = vpop.permute.xlu0 %201
  %v204 = vadd.f32 %v194, %v202
  %v205 = vtanh.pop %v204
  %207 = vrot.lane.b32.xlu0 %v205, 64
  %v208 = vpop.permute.xlu0 %207
  %v210 = vmul.f32 %v193, %v208
  %212 = vrot.lane.b32.xlu0 %v210, 32
  %v213 = vpop.permute.xlu0 %212
  %v214 = vsel %vm110, %v213, 0
  %216 = vmatprep.subr.mxu0 0.0
  %217 = vmatpush1.msra.mxu0 0.0
  %218 = vmatprep.subr.mxu0 0.0
  %219 = vmatpush1.msra.mxu0 0.0
  %220 = vmatprep.subr.mxu0 0.0
  %221 = vmatpush1.msra.mxu0 0.0
  %222 = vmatprep.subr.mxu0 0.0
  %223 = vmatpush1.msra.mxu0 0.0
  %224 = vmatprep.subr.mxu0 0.0
  %225 = vmatpush1.msra.mxu0 0.0
  %226 = vmatprep.subr.mxu0 0.0
  %227 = vmatpush1.msra.mxu0 0.0
  %228 = vmatprep.subr.mxu0 0.0
  %229 = vmatpush1.msra.mxu0 0.0
  %230 = vmatprep.subr.mxu0 0.0
  %231 = vmatpush1.msra.mxu0 0.0
  %232 = vmatprep.subr.mxu0 0.0
  %233 = vmatpush1.msra.mxu0 0.0
  %234 = vmatprep.subr.mxu0 0.0
  %235 = vmatpush1.msra.mxu0 0.0
  %236 = vmatprep.subr.mxu0 0.0
  %237 = vmatpush1.msra.mxu0 0.0
  %238 = vmatprep.subr.mxu0 0.0
  %239 = vmatpush1.msra.mxu0 0.0
  %240 = vmatprep.subr.mxu0 0.0
  %241 = vmatpush1.msra.mxu0 %v104
  %242 = vmatprep.subr.mxu0 0.0
  %243 = vmatpush1.msra.mxu0 %v103
  %244 = vmatprep.subr.mxu0 0.0
  %245 = vmatpush1.msra.mxu0 %v102
  %246 = vmatprep.subr.mxu0 0.0
  %247 = vmatpush1.msra.mxu0 %v101
  %248 = vmatprep.subr.mxu0 0.0
  %249 = vmatpush2.msra.mxu0 0.0
  %250 = vmatprep.subr.mxu0 0.0
  %251 = vmatpush2.msra.mxu0 0.0
  %252 = vmatprep.subr.mxu0 0.0
  %253 = vmatpush2.msra.mxu0 0.0
  %254 = vmatprep.subr.mxu0 0.0
  %255 = vmatpush2.msra.mxu0 0.0
  %256 = vmatprep.subr.mxu0 0.0
  %257 = vmatpush2.msra.mxu0 0.0
  %258 = vmatprep.subr.mxu0 0.0
  %259 = vmatpush2.msra.mxu0 0.0
  %260 = vmatprep.subr.mxu0 0.0
  %261 = vmatpush2.msra.mxu0 0.0
  %262 = vmatprep.subr.mxu0 0.0
  %263 = vmatpush2.msra.mxu0 0.0
  %264 = vmatprep.subr.mxu0 0.0
  %265 = vmatpush2.msra.mxu0 0.0
  %266 = vmatprep.subr.mxu0 0.0
  %267 = vmatpush2.msra.mxu0 0.0
  %268 = vmatprep.subr.mxu0 0.0
  %269 = vmatpush2.msra.mxu0 0.0
  %270 = vmatprep.subr.mxu0 0.0
  %271 = vmatpush2.msra.mxu0 0.0
  %272 = vmatprep.subr.mxu0 0.0
  %273 = vmatpush2.msra.mxu0 0.0
  %274 = vmatprep.subr.mxu0 0.0
  %275 = vmatpush2.msra.mxu0 0.0
  %276 = vmatprep.subr.mxu0 0.0
  %277 = vmatpush2.msra.mxu0 0.0
  %278 = vmatprep.subr.mxu0 0.0
  %279 = vmatpush2.msra.mxu0 0.0
  %280 = vmatprep.mubr.f32.mxu0 0.0
  %281 = vmatmul.mubr.f32.gmra.mxu0 %v214
  %v282 = vpop.f32.mrf.mxu0
  %v283 = vadd.f32 %v94, %v282
  %v284 = vpop.f32.mrf.mxu0
  %285 = vdwg.mxu0
  %v286 = vxor.u32 %v283, 2147483648
  %v287 = vmul.f32 %v286, 1.442695
  %v288 = vpow.pop %v287
  %v289 = vadd.f32 %v288, 1.0
  %v290 = vrcp.pop %v289
  %v291 = vmul.f32 1.0, %v290
  %v292 = vtanh.pop %v283
  %v293 = vsel %vm192, %v291, %v292
  %v294 = vmul.f32 %v293, %v204
  %296 = vrot.lane.b32.xlu0 %v293, 64
  %v297 = vpop.permute.xlu0 %296
  %v299 = vmul.f32 %v293, %v297
  %301 = vrot.lane.b32.xlu0 %v299, 32
  %v302 = vpop.permute.xlu0 %301
  %v304 = vadd.f32 %v294, %v302
  %v305 = vtanh.pop %v304
  %307 = vrot.lane.b32.xlu0 %v305, 64
  %v308 = vpop.permute.xlu0 %307
  %v310 = vmul.f32 %v293, %v308
  %312 = vrot.lane.b32.xlu0 %v310, 32
  %v313 = vpop.permute.xlu0 %312
  %v314 = vsel %vm110, %v313, 0
  %316 = vmatprep.subr.mxu0 0.0
  %317 = vmatpush1.msra.mxu0 0.0
  %318 = vmatprep.subr.mxu0 0.0
  %319 = vmatpush1.msra.mxu0 0.0
  %320 = vmatprep.subr.mxu0 0.0
  %321 = vmatpush1.msra.mxu0 0.0
  %322 = vmatprep.subr.mxu0 0.0
  %323 = vmatpush1.msra.mxu0 0.0
  %324 = vmatprep.subr.mxu0 0.0
  %325 = vmatpush1.msra.mxu0 0.0
  %326 = vmatprep.subr.mxu0 0.0
  %327 = vmatpush1.msra.mxu0 0.0
  %328 = vmatprep.subr.mxu0 0.0
  %329 = vmatpush1.msra.mxu0 0.0
  %330 = vmatprep.subr.mxu0 0.0
  %331 = vmatpush1.msra.mxu0 0.0
  %332 = vmatprep.subr.mxu0 0.0
  %333 = vmatpush1.msra.mxu0 0.0
  %334 = vmatprep.subr.mxu0 0.0
  %335 = vmatpush1.msra.mxu0 0.0
  %336 = vmatprep.subr.mxu0 0.0
  %337 = vmatpush1.msra.mxu0 0.0
  %338 = vmatprep.subr.mxu0 0.0
  %339 = vmatpush1.msra.mxu0 0.0
  %340 = vmatprep.subr.mxu0 0.0
  %341 = vmatpush1.msra.mxu0 %v104
  %342 = vmatprep.subr.mxu0 0.0
  %343 = vmatpush1.msra.mxu0 %v103
  %344 = vmatprep.subr.mxu0 0.0
  %345 = vmatpush1.msra.mxu0 %v102
  %346 = vmatprep.subr.mxu0 0.0
  %347 = vmatpush1.msra.mxu0 %v101
  %348 = vmatprep.subr.mxu0 0.0
  %349 = vmatpush2.msra.mxu0 0.0
  %350 = vmatprep.subr.mxu0 0.0
  %351 = vmatpush2.msra.mxu0 0.0
  %352 = vmatprep.subr.mxu0 0.0
  %353 = vmatpush2.msra.mxu0 0.0
  %354 = vmatprep.subr.mxu0 0.0
  %355 = vmatpush2.msra.mxu0 0.0
  %356 = vmatprep.subr.mxu0 0.0
  %357 = vmatpush2.msra.mxu0 0.0
  %358 = vmatprep.subr.mxu0 0.0
  %359 = vmatpush2.msra.mxu0 0.0
  %360 = vmatprep.subr.mxu0 0.0
  %361 = vmatpush2.msra.mxu0 0.0
  %362 = vmatprep.subr.mxu0 0.0
  %363 = vmatpush2.msra.mxu0 0.0
  %364 = vmatprep.subr.mxu0 0.0
  %365 = vmatpush2.msra.mxu0 0.0
  %366 = vmatprep.subr.mxu0 0.0
  %367 = vmatpush2.msra.mxu0 0.0
  %368 = vmatprep.subr.mxu0 0.0
  %369 = vmatpush2.msra.mxu0 0.0
  %370 = vmatprep.subr.mxu0 0.0
  %371 = vmatpush2.msra.mxu0 0.0
  %372 = vmatprep.subr.mxu0 0.0
  %373 = vmatpush2.msra.mxu0 0.0
  %374 = vmatprep.subr.mxu0 0.0
  %375 = vmatpush2.msra.mxu0 0.0
  %376 = vmatprep.subr.mxu0 0.0
  %377 = vmatpush2.msra.mxu0 0.0
  %378 = vmatprep.subr.mxu0 0.0
  %379 = vmatpush2.msra.mxu0 0.0
  %380 = vmatprep.mubr.f32.mxu0 0.0
  %381 = vmatmul.mubr.f32.gmra.mxu0 %v314
  %v382 = vpop.f32.mrf.mxu0
  %v383 = vadd.f32 %v95, %v382
  %v384 = vpop.f32.mrf.mxu0
  %385 = vdwg.mxu0
  %v386 = vxor.u32 %v383, 2147483648
  %v387 = vmul.f32 %v386, 1.442695
  %v388 = vpow.pop %v387
  %v389 = vadd.f32 %v388, 1.0
  %v390 = vrcp.pop %v389
  %v391 = vmul.f32 1.0, %v390
  %v392 = vtanh.pop %v383
  %v393 = vsel %vm192, %v391, %v392
  %v394 = vmul.f32 %v393, %v304
  %396 = vrot.lane.b32.xlu0 %v393, 64
  %v397 = vpop.permute.xlu0 %396
  %v399 = vmul.f32 %v393, %v397
  %401 = vrot.lane.b32.xlu0 %v399, 32
  %v402 = vpop.permute.xlu0 %401
  %v404 = vadd.f32 %v394, %v402
  %v405 = vtanh.pop %v404
  %407 = vrot.lane.b32.xlu0 %v405, 64
  %v408 = vpop.permute.xlu0 %407
  %v410 = vmul.f32 %v393, %v408
  %412 = vrot.lane.b32.xlu0 %v410, 32
  %v413 = vpop.permute.xlu0 %412
  %v414 = vsel %vm110, %v413, 0
  %416 = vmatprep.subr.mxu0 0.0
  %417 = vmatpush1.msra.mxu0 0.0
  %418 = vmatprep.subr.mxu0 0.0
  %419 = vmatpush1.msra.mxu0 0.0
  %420 = vmatprep.subr.mxu0 0.0
  %421 = vmatpush1.msra.mxu0 0.0
  %422 = vmatprep.subr.mxu0 0.0
  %423 = vmatpush1.msra.mxu0 0.0
  %424 = vmatprep.subr.mxu0 0.0
  %425 = vmatpush1.msra.mxu0 0.0
  %426 = vmatprep.subr.mxu0 0.0
  %427 = vmatpush1.msra.mxu0 0.0
  %428 = vmatprep.subr.mxu0 0.0
  %429 = vmatpush1.msra.mxu0 0.0
  %430 = vmatprep.subr.mxu0 0.0
  %431 = vmatpush1.msra.mxu0 0.0
  %432 = vmatprep.subr.mxu0 0.0
  %433 = vmatpush1.msra.mxu0 0.0
  %434 = vmatprep.subr.mxu0 0.0
  %435 = vmatpush1.msra.mxu0 0.0
  %436 = vmatprep.subr.mxu0 0.0
  %437 = vmatpush1.msra.mxu0 0.0
  %438 = vmatprep.subr.mxu0 0.0
  %439 = vmatpush1.msra.mxu0 0.0
  %440 = vmatprep.subr.mxu0 0.0
  %441 = vmatpush1.msra.mxu0 %v104
  %442 = vmatprep.subr.mxu0 0.0
  %443 = vmatpush1.msra.mxu0 %v103
  %444 = vmatprep.subr.mxu0 0.0
  %445 = vmatpush1.msra.mxu0 %v102
  %446 = vmatprep.subr.mxu0 0.0
  %447 = vmatpush1.msra.mxu0 %v101
  %448 = vmatprep.subr.mxu0 0.0
  %449 = vmatpush2.msra.mxu0 0.0
  %450 = vmatprep.subr.mxu0 0.0
  %451 = vmatpush2.msra.mxu0 0.0
  %452 = vmatprep.subr.mxu0 0.0
  %453 = vmatpush2.msra.mxu0 0.0
  %454 = vmatprep.subr.mxu0 0.0
  %455 = vmatpush2.msra.mxu0 0.0
  %456 = vmatprep.subr.mxu0 0.0
  %457 = vmatpush2.msra.mxu0 0.0
  %458 = vmatprep.subr.mxu0 0.0
  %459 = vmatpush2.msra.mxu0 0.0
  %460 = vmatprep.subr.mxu0 0.0
  %461 = vmatpush2.msra.mxu0 0.0
  %462 = vmatprep.subr.mxu0 0.0
  %463 = vmatpush2.msra.mxu0 0.0
  %464 = vmatprep.subr.mxu0 0.0
  %465 = vmatpush2.msra.mxu0 0.0
  %466 = vmatprep.subr.mxu0 0.0
  %467 = vmatpush2.msra.mxu0 0.0
  %468 = vmatprep.subr.mxu0 0.0
  %469 = vmatpush2.msra.mxu0 0.0
  %470 = vmatprep.subr.mxu0 0.0
  %471 = vmatpush2.msra.mxu0 0.0
  %472 = vmatprep.subr.mxu0 0.0
  %473 = vmatpush2.msra.mxu0 0.0
  %474 = vmatprep.subr.mxu0 0.0
  %475 = vmatpush2.msra.mxu0 0.0
  %476 = vmatprep.subr.mxu0 0.0
  %477 = vmatpush2.msra.mxu0 0.0
  %478 = vmatprep.subr.mxu0 0.0
  %479 = vmatpush2.msra.mxu0 0.0
  %480 = vmatprep.mubr.f32.mxu0 0.0
  %481 = vmatmul.mubr.f32.gmra.mxu0 %v414
  %v482 = vpop.f32.mrf.mxu0
  %v483 = vadd.f32 %v96, %v482
  %v484 = vpop.f32.mrf.mxu0
  %485 = vdwg.mxu0
  %v486 = vxor.u32 %v483, 2147483648
  %v487 = vmul.f32 %v486, 1.442695
  %v488 = vpow.pop %v487
  %v489 = vadd.f32 %v488, 1.0
  %v490 = vrcp.pop %v489
  %v491 = vmul.f32 1.0, %v490
  %v492 = vtanh.pop %v483
  %v493 = vsel %vm192, %v491, %v492
  %v494 = vmul.f32 %v493, %v404
  %496 = vrot.lane.b32.xlu0 %v493, 64
  %v497 = vpop.permute.xlu0 %496
  %v499 = vmul.f32 %v493, %v497
  %501 = vrot.lane.b32.xlu0 %v499, 32
  %v502 = vpop.permute.xlu0 %501
  %v504 = vadd.f32 %v494, %v502
  %v505 = vtanh.pop %v504
  %507 = vrot.lane.b32.xlu0 %v505, 64
  %v508 = vpop.permute.xlu0 %507
  %v510 = vmul.f32 %v493, %v508
  %512 = vrot.lane.b32.xlu0 %v510, 32
  %v513 = vpop.permute.xlu0 %512
  %v514 = vsel %vm110, %v513, 0
  %516 = vmatprep.subr.mxu0 0.0
  %517 = vmatpush1.msra.mxu0 0.0
  %518 = vmatprep.subr.mxu0 0.0
  %519 = vmatpush1.msra.mxu0 0.0
  %520 = vmatprep.subr.mxu0 0.0
  %521 = vmatpush1.msra.mxu0 0.0
  %522 = vmatprep.subr.mxu0 0.0
  %523 = vmatpush1.msra.mxu0 0.0
  %524 = vmatprep.subr.mxu0 0.0
  %525 = vmatpush1.msra.mxu0 0.0
  %526 = vmatprep.subr.mxu0 0.0
  %527 = vmatpush1.msra.mxu0 0.0
  %528 = vmatprep.subr.mxu0 0.0
  %529 = vmatpush1.msra.mxu0 0.0
  %530 = vmatprep.subr.mxu0 0.0
  %531 = vmatpush1.msra.mxu0 0.0
  %532 = vmatprep.subr.mxu0 0.0
  %533 = vmatpush1.msra.mxu0 0.0
  %534 = vmatprep.subr.mxu0 0.0
  %535 = vmatpush1.msra.mxu0 0.0
  %536 = vmatprep.subr.mxu0 0.0
  %537 = vmatpush1.msra.mxu0 0.0
  %538 = vmatprep.subr.mxu0 0.0
  %539 = vmatpush1.msra.mxu0 0.0
  %540 = vmatprep.subr.mxu0 0.0
  %541 = vmatpush1.msra.mxu0 %v104
  %542 = vmatprep.subr.mxu0 0.0
  %543 = vmatpush1.msra.mxu0 %v103
  %544 = vmatprep.subr.mxu0 0.0
  %545 = vmatpush1.msra.mxu0 %v102
  %546 = vmatprep.subr.mxu0 0.0
  %547 = vmatpush1.msra.mxu0 %v101
  %548 = vmatprep.subr.mxu0 0.0
  %549 = vmatpush2.msra.mxu0 0.0
  %550 = vmatprep.subr.mxu0 0.0
  %551 = vmatpush2.msra.mxu0 0.0
  %552 = vmatprep.subr.mxu0 0.0
  %553 = vmatpush2.msra.mxu0 0.0
  %554 = vmatprep.subr.mxu0 0.0
  %555 = vmatpush2.msra.mxu0 0.0
  %556 = vmatprep.subr.mxu0 0.0
  %557 = vmatpush2.msra.mxu0 0.0
  %558 = vmatprep.subr.mxu0 0.0
  %559 = vmatpush2.msra.mxu0 0.0
  %560 = vmatprep.subr.mxu0 0.0
  %561 = vmatpush2.msra.mxu0 0.0
  %562 = vmatprep.subr.mxu0 0.0
  %563 = vmatpush2.msra.mxu0 0.0
  %564 = vmatprep.subr.mxu0 0.0
  %565 = vmatpush2.msra.mxu0 0.0
  %566 = vmatprep.subr.mxu0 0.0
  %567 = vmatpush2.msra.mxu0 0.0
  %568 = vmatprep.subr.mxu0 0.0
  %569 = vmatpush2.msra.mxu0 0.0
  %570 = vmatprep.subr.mxu0 0.0
  %571 = vmatpush2.msra.mxu0 0.0
  %572 = vmatprep.subr.mxu0 0.0
  %573 = vmatpush2.msra.mxu0 0.0
  %574 = vmatprep.subr.mxu0 0.0
  %575 = vmatpush2.msra.mxu0 0.0
  %576 = vmatprep.subr.mxu0 0.0
  %577 = vmatpush2.msra.mxu0 0.0
  %578 = vmatprep.subr.mxu0 0.0
  %579 = vmatpush2.msra.mxu0 0.0
  %580 = vmatprep.mubr.f32.mxu0 0.0
  %581 = vmatmul.mubr.f32.gmra.mxu0 %v514
  %v582 = vpop.f32.mrf.mxu0
  %v583 = vadd.f32 %v97, %v582
  %v584 = vpop.f32.mrf.mxu0
  %585 = vdwg.mxu0
  %v586 = vxor.u32 %v583, 2147483648
  %v587 = vmul.f32 %v586, 1.442695
  %v588 = vpow.pop %v587
  %v589 = vadd.f32 %v588, 1.0
  %v590 = vrcp.pop %v589
  %v591 = vmul.f32 1.0, %v590
  %v592 = vtanh.pop %v583
  %v593 = vsel %vm192, %v591, %v592
  %v594 = vmul.f32 %v593, %v504
  %596 = vrot.lane.b32.xlu0 %v593, 64
  %v597 = vpop.permute.xlu0 %596
  %v599 = vmul.f32 %v593, %v597
  %601 = vrot.lane.b32.xlu0 %v599, 32
  %v602 = vpop.permute.xlu0 %601
  %v604 = vadd.f32 %v594, %v602
  %v605 = vtanh.pop %v604
  %607 = vrot.lane.b32.xlu0 %v605, 64
  %v608 = vpop.permute.xlu0 %607
  %v610 = vmul.f32 %v593, %v608
  %612 = vrot.lane.b32.xlu0 %v610, 32
  %v613 = vpop.permute.xlu0 %612
  %v614 = vsel %vm110, %v613, 0
  %616 = vmatprep.subr.mxu0 0.0
  %617 = vmatpush1.msra.mxu0 0.0
  %618 = vmatprep.subr.mxu0 0.0
  %619 = vmatpush1.msra.mxu0 0.0
  %620 = vmatprep.subr.mxu0 0.0
  %621 = vmatpush1.msra.mxu0 0.0
  %622 = vmatprep.subr.mxu0 0.0
  %623 = vmatpush1.msra.mxu0 0.0
  %624 = vmatprep.subr.mxu0 0.0
  %625 = vmatpush1.msra.mxu0 0.0
  %626 = vmatprep.subr.mxu0 0.0
  %627 = vmatpush1.msra.mxu0 0.0
  %628 = vmatprep.subr.mxu0 0.0
  %629 = vmatpush1.msra.mxu0 0.0
  %630 = vmatprep.subr.mxu0 0.0
  %631 = vmatpush1.msra.mxu0 0.0
  %632 = vmatprep.subr.mxu0 0.0
  %633 = vmatpush1.msra.mxu0 0.0
  %634 = vmatprep.subr.mxu0 0.0
  %635 = vmatpush1.msra.mxu0 0.0
  %636 = vmatprep.subr.mxu0 0.0
  %637 = vmatpush1.msra.mxu0 0.0
  %638 = vmatprep.subr.mxu0 0.0
  %639 = vmatpush1.msra.mxu0 0.0
  %640 = vmatprep.subr.mxu0 0.0
  %641 = vmatpush1.msra.mxu0 %v104
  %642 = vmatprep.subr.mxu0 0.0
  %643 = vmatpush1.msra.mxu0 %v103
  %644 = vmatprep.subr.mxu0 0.0
  %645 = vmatpush1.msra.mxu0 %v102
  %646 = vmatprep.subr.mxu0 0.0
  %647 = vmatpush1.msra.mxu0 %v101
  %648 = vmatprep.subr.mxu0 0.0
  %649 = vmatpush2.msra.mxu0 0.0
  %650 = vmatprep.subr.mxu0 0.0
  %651 = vmatpush2.msra.mxu0 0.0
  %652 = vmatprep.subr.mxu0 0.0
  %653 = vmatpush2.msra.mxu0 0.0
  %654 = vmatprep.subr.mxu0 0.0
  %655 = vmatpush2.msra.mxu0 0.0
  %656 = vmatprep.subr.mxu0 0.0
  %657 = vmatpush2.msra.mxu0 0.0
  %658 = vmatprep.subr.mxu0 0.0
  %659 = vmatpush2.msra.mxu0 0.0
  %660 = vmatprep.subr.mxu0 0.0
  %661 = vmatpush2.msra.mxu0 0.0
  %662 = vmatprep.subr.mxu0 0.0
  %663 = vmatpush2.msra.mxu0 0.0
  %664 = vmatprep.subr.mxu0 0.0
  %665 = vmatpush2.msra.mxu0 0.0
  %666 = vmatprep.subr.mxu0 0.0
  %667 = vmatpush2.msra.mxu0 0.0
  %668 = vmatprep.subr.mxu0 0.0
  %669 = vmatpush2.msra.mxu0 0.0
  %670 = vmatprep.subr.mxu0 0.0
  %671 = vmatpush2.msra.mxu0 0.0
  %672 = vmatprep.subr.mxu0 0.0
  %673 = vmatpush2.msra.mxu0 0.0
  %674 = vmatprep.subr.mxu0 0.0
  %675 = vmatpush2.msra.mxu0 0.0
  %676 = vmatprep.subr.mxu0 0.0
  %677 = vmatpush2.msra.mxu0 0.0
  %678 = vmatprep.subr.mxu0 0.0
  %679 = vmatpush2.msra.mxu0 0.0
  %680 = vmatprep.mubr.f32.mxu0 0.0
  %681 = vmatmul.mubr.f32.gmra.mxu0 %v614
  %v682 = vpop.f32.mrf.mxu0
  %v683 = vadd.f32 %v98, %v682
  %v684 = vpop.f32.mrf.mxu0
  %685 = vdwg.mxu0
  %v686 = vxor.u32 %v683, 2147483648
  %v687 = vmul.f32 %v686, 1.442695
  %v688 = vpow.pop %v687
  %v689 = vadd.f32 %v688, 1.0
  %v690 = vrcp.pop %v689
  %v691 = vmul.f32 1.0, %v690
  %v692 = vtanh.pop %v683
  %v693 = vsel %vm192, %v691, %v692
  %v694 = vmul.f32 %v693, %v604
  %696 = vrot.lane.b32.xlu0 %v693, 64
  %v697 = vpop.permute.xlu0 %696
  %v699 = vmul.f32 %v693, %v697
  %701 = vrot.lane.b32.xlu0 %v699, 32
  %v702 = vpop.permute.xlu0 %701
  %v704 = vadd.f32 %v694, %v702
  %v705 = vtanh.pop %v704
  %707 = vrot.lane.b32.xlu0 %v705, 64
  %v708 = vpop.permute.xlu0 %707
  %v710 = vmul.f32 %v693, %v708
  %712 = vrot.lane.b32.xlu0 %v710, 32
  %v713 = vpop.permute.xlu0 %712
  %v714 = vsel %vm110, %v713, 0
  %716 = vmatprep.subr.mxu0 0.0
  %717 = vmatpush1.msra.mxu0 0.0
  %718 = vmatprep.subr.mxu0 0.0
  %719 = vmatpush1.msra.mxu0 0.0
  %720 = vmatprep.subr.mxu0 0.0
  %721 = vmatpush1.msra.mxu0 0.0
  %722 = vmatprep.subr.mxu0 0.0
  %723 = vmatpush1.msra.mxu0 0.0
  %724 = vmatprep.subr.mxu0 0.0
  %725 = vmatpush1.msra.mxu0 0.0
  %726 = vmatprep.subr.mxu0 0.0
  %727 = vmatpush1.msra.mxu0 0.0
  %728 = vmatprep.subr.mxu0 0.0
  %729 = vmatpush1.msra.mxu0 0.0
  %730 = vmatprep.subr.mxu0 0.0
  %731 = vmatpush1.msra.mxu0 0.0
  %732 = vmatprep.subr.mxu0 0.0
  %733 = vmatpush1.msra.mxu0 0.0
  %734 = vmatprep.subr.mxu0 0.0
  %735 = vmatpush1.msra.mxu0 0.0
  %736 = vmatprep.subr.mxu0 0.0
  %737 = vmatpush1.msra.mxu0 0.0
  %738 = vmatprep.subr.mxu0 0.0
  %739 = vmatpush1.msra.mxu0 0.0
  %740 = vmatprep.subr.mxu0 0.0
  %741 = vmatpush1.msra.mxu0 %v104
  %742 = vmatprep.subr.mxu0 0.0
  %743 = vmatpush1.msra.mxu0 %v103
  %744 = vmatprep.subr.mxu0 0.0
  %745 = vmatpush1.msra.mxu0 %v102
  %746 = vmatprep.subr.mxu0 0.0
  %747 = vmatpush1.msra.mxu0 %v101
  %748 = vmatprep.subr.mxu0 0.0
  %749 = vmatpush2.msra.mxu0 0.0
  %750 = vmatprep.subr.mxu0 0.0
  %751 = vmatpush2.msra.mxu0 0.0
  %752 = vmatprep.subr.mxu0 0.0
  %753 = vmatpush2.msra.mxu0 0.0
  %754 = vmatprep.subr.mxu0 0.0
  %755 = vmatpush2.msra.mxu0 0.0
  %756 = vmatprep.subr.mxu0 0.0
  %757 = vmatpush2.msra.mxu0 0.0
  %758 = vmatprep.subr.mxu0 0.0
  %759 = vmatpush2.msra.mxu0 0.0
  %760 = vmatprep.subr.mxu0 0.0
  %761 = vmatpush2.msra.mxu0 0.0
  %762 = vmatprep.subr.mxu0 0.0
  %763 = vmatpush2.msra.mxu0 0.0
  %764 = vmatprep.subr.mxu0 0.0
  %765 = vmatpush2.msra.mxu0 0.0
  %766 = vmatprep.subr.mxu0 0.0
  %767 = vmatpush2.msra.mxu0 0.0
  %768 = vmatprep.subr.mxu0 0.0
  %769 = vmatpush2.msra.mxu0 0.0
  %770 = vmatprep.subr.mxu0 0.0
  %771 = vmatpush2.msra.mxu0 0.0
  %772 = vmatprep.subr.mxu0 0.0
  %773 = vmatpush2.msra.mxu0 0.0
  %774 = vmatprep.subr.mxu0 0.0
  %775 = vmatpush2.msra.mxu0 0.0
  %776 = vmatprep.subr.mxu0 0.0
  %777 = vmatpush2.msra.mxu0 0.0
  %778 = vmatprep.subr.mxu0 0.0
  %779 = vmatpush2.msra.mxu0 0.0
  %780 = vmatprep.mubr.f32.mxu0 0.0
  %781 = vmatmul.mubr.f32.gmra.mxu0 %v714
  %v782 = vpop.f32.mrf.mxu0
  %v783 = vadd.f32 %v99, %v782
  %v784 = vpop.f32.mrf.mxu0
  %785 = vdwg.mxu0
  %v786 = vxor.u32 %v783, 2147483648
  %v787 = vmul.f32 %v786, 1.442695
  %v788 = vpow.pop %v787
  %v789 = vadd.f32 %v788, 1.0
  %v790 = vrcp.pop %v789
  %v791 = vmul.f32 1.0, %v790
  %v792 = vtanh.pop %v783
  %v793 = vsel %vm192, %v791, %v792
  %v794 = vmul.f32 %v793, %v704
  %796 = vrot.lane.b32.xlu0 %v793, 64
  %v797 = vpop.permute.xlu0 %796
  %v799 = vmul.f32 %v793, %v797
  %801 = vrot.lane.b32.xlu0 %v799, 32
  %v802 = vpop.permute.xlu0 %801
  %v804 = vadd.f32 %v794, %v802
  %v805 = vtanh.pop %v804
  %807 = vrot.lane.b32.xlu0 %v805, 64
  %v808 = vpop.permute.xlu0 %807
  %v810 = vmul.f32 %v793, %v808
  %812 = vrot.lane.b32.xlu0 %v810, 32
  %v813 = vpop.permute.xlu0 %812
  %v814 = vsel %vm110, %v813, 0
  %816 = vmatprep.subr.mxu0 0.0
  %817 = vmatpush1.msra.mxu0 0.0
  %818 = vmatprep.subr.mxu0 0.0
  %819 = vmatpush1.msra.mxu0 0.0
  %820 = vmatprep.subr.mxu0 0.0
  %821 = vmatpush1.msra.mxu0 0.0
  %822 = vmatprep.subr.mxu0 0.0
  %823 = vmatpush1.msra.mxu0 0.0
  %824 = vmatprep.subr.mxu0 0.0
  %825 = vmatpush1.msra.mxu0 0.0
  %826 = vmatprep.subr.mxu0 0.0
  %827 = vmatpush1.msra.mxu0 0.0
  %828 = vmatprep.subr.mxu0 0.0
  %829 = vmatpush1.msra.mxu0 0.0
  %830 = vmatprep.subr.mxu0 0.0
  %831 = vmatpush1.msra.mxu0 0.0
  %832 = vmatprep.subr.mxu0 0.0
  %833 = vmatpush1.msra.mxu0 0.0
  %834 = vmatprep.subr.mxu0 0.0
  %835 = vmatpush1.msra.mxu0 0.0
  %836 = vmatprep.subr.mxu0 0.0
  %837 = vmatpush1.msra.mxu0 0.0
  %838 = vmatprep.subr.mxu0 0.0
  %839 = vmatpush1.msra.mxu0 0.0
  %840 = vmatprep.subr.mxu0 0.0
  %841 = vmatpush1.msra.mxu0 %v104
  %842 = vmatprep.subr.mxu0 0.0
  %843 = vmatpush1.msra.mxu0 %v103
  %844 = vmatprep.subr.mxu0 0.0
  %845 = vmatpush1.msra.mxu0 %v102
  %846 = vmatprep.subr.mxu0 0.0
  %847 = vmatpush1.msra.mxu0 %v101
  %848 = vmatprep.subr.mxu0 0.0
  %849 = vmatpush2.msra.mxu0 0.0
  %850 = vmatprep.subr.mxu0 0.0
  %851 = vmatpush2.msra.mxu0 0.0
  %852 = vmatprep.subr.mxu0 0.0
  %853 = vmatpush2.msra.mxu0 0.0
  %854 = vmatprep.subr.mxu0 0.0
  %855 = vmatpush2.msra.mxu0 0.0
  %856 = vmatprep.subr.mxu0 0.0
  %857 = vmatpush2.msra.mxu0 0.0
  %858 = vmatprep.subr.mxu0 0.0
  %859 = vmatpush2.msra.mxu0 0.0
  %860 = vmatprep.subr.mxu0 0.0
  %861 = vmatpush2.msra.mxu0 0.0
  %862 = vmatprep.subr.mxu0 0.0
  %863 = vmatpush2.msra.mxu0 0.0
  %864 = vmatprep.subr.mxu0 0.0
  %865 = vmatpush2.msra.mxu0 0.0
  %866 = vmatprep.subr.mxu0 0.0
  %867 = vmatpush2.msra.mxu0 0.0
  %868 = vmatprep.subr.mxu0 0.0
  %869 = vmatpush2.msra.mxu0 0.0
  %870 = vmatprep.subr.mxu0 0.0
  %871 = vmatpush2.msra.mxu0 0.0
  %872 = vmatprep.subr.mxu0 0.0
  %873 = vmatpush2.msra.mxu0 0.0
  %874 = vmatprep.subr.mxu0 0.0
  %875 = vmatpush2.msra.mxu0 0.0
  %876 = vmatprep.subr.mxu0 0.0
  %877 = vmatpush2.msra.mxu0 0.0
  %878 = vmatprep.subr.mxu0 0.0
  %879 = vmatpush2.msra.mxu0 0.0
  %880 = vmatprep.mubr.f32.mxu0 0.0
  %881 = vmatmul.mubr.f32.gmra.mxu0 %v814
  %v882 = vpop.f32.mrf.mxu0
  %v883 = vadd.f32 %v100, %v882
  %v884 = vpop.f32.mrf.mxu0
  %885 = vdwg.mxu0
  %v886 = vxor.u32 %v883, 2147483648
  %v887 = vmul.f32 %v886, 1.442695
  %v888 = vpow.pop %v887
  %v889 = vadd.f32 %v888, 1.0
  %v890 = vrcp.pop %v889
  %v891 = vmul.f32 1.0, %v890
  %v892 = vtanh.pop %v883
  %v893 = vsel %vm192, %v891, %v892
  %v894 = vmul.f32 %v893, %v804
  %896 = vrot.lane.b32.xlu0 %v893, 64
  %v897 = vpop.permute.xlu0 %896
  %v899 = vmul.f32 %v893, %v897
  %901 = vrot.lane.b32.xlu0 %v899, 32
  %v902 = vpop.permute.xlu0 %901
  %v904 = vadd.f32 %v894, %v902
  %v905 = vtanh.pop %v904
  %907 = vrot.lane.b32.xlu0 %v905, 64
  %v908 = vpop.permute.xlu0 %907
  %v910 = vmul.f32 %v893, %v908
  %v911 = vld [vmem:[%s4] sm:$0xff]
  %v912 = vld [vmem:[%s4 + $0x8] sm:$0xff]
  %v913 = vld [vmem:[%s4 + $0x10] sm:$0xff]
  %v914 = vld [vmem:[%s4 + $0x18] sm:$0xff]
  %v915 = vld [vmem:[%s5] sm:$0x1]
  %v917 = vlaneseq
  %v918 = vshrl.u32 %v917, 7
  %v919 = vsub.s32 0, %v918
  %v920 = vrot.slane %v915, %v919
  %923 = vrot.lane.b32.xlu0 %v910, 32
  %v924 = vpop.permute.xlu0 %923
  %v925 = vsel %vm110, %v924, 0
  %927 = vmatprep.subr.mxu0 0.0
  %928 = vmatpush1.msra.mxu0 0.0
  %929 = vmatprep.subr.mxu0 0.0
  %930 = vmatpush1.msra.mxu0 0.0
  %931 = vmatprep.subr.mxu0 0.0
  %932 = vmatpush1.msra.mxu0 0.0
  %933 = vmatprep.subr.mxu0 0.0
  %934 = vmatpush1.msra.mxu0 0.0
  %935 = vmatprep.subr.mxu0 0.0
  %936 = vmatpush1.msra.mxu0 0.0
  %937 = vmatprep.subr.mxu0 0.0
  %938 = vmatpush1.msra.mxu0 0.0
  %939 = vmatprep.subr.mxu0 0.0
  %940 = vmatpush1.msra.mxu0 0.0
  %941 = vmatprep.subr.mxu0 0.0
  %942 = vmatpush1.msra.mxu0 0.0
  %943 = vmatprep.subr.mxu0 0.0
  %944 = vmatpush1.msra.mxu0 0.0
  %945 = vmatprep.subr.mxu0 0.0
  %946 = vmatpush1.msra.mxu0 0.0
  %947 = vmatprep.subr.mxu0 0.0
  %948 = vmatpush1.msra.mxu0 0.0
  %949 = vmatprep.subr.mxu0 0.0
  %950 = vmatpush1.msra.mxu0 0.0
  %951 = vmatprep.subr.mxu0 0.0
  %952 = vmatpush1.msra.mxu0 %v914
  %953 = vmatprep.subr.mxu0 0.0
  %954 = vmatpush1.msra.mxu0 %v913
  %955 = vmatprep.subr.mxu0 0.0
  %956 = vmatpush1.msra.mxu0 %v912
  %957 = vmatprep.subr.mxu0 0.0
  %958 = vmatpush1.msra.mxu0 %v911
  %959 = vmatprep.subr.mxu0 0.0
  %960 = vmatpush2.msra.mxu0 0.0
  %961 = vmatprep.subr.mxu0 0.0
  %962 = vmatpush2.msra.mxu0 0.0
  %963 = vmatprep.subr.mxu0 0.0
  %964 = vmatpush2.msra.mxu0 0.0
  %965 = vmatprep.subr.mxu0 0.0
  %966 = vmatpush2.msra.mxu0 0.0
  %967 = vmatprep.subr.mxu0 0.0
  %968 = vmatpush2.msra.mxu0 0.0
  %969 = vmatprep.subr.mxu0 0.0
  %970 = vmatpush2.msra.mxu0 0.0
  %971 = vmatprep.subr.mxu0 0.0
  %972 = vmatpush2.msra.mxu0 0.0
  %973 = vmatprep.subr.mxu0 0.0
  %974 = vmatpush2.msra.mxu0 0.0
  %975 = vmatprep.subr.mxu0 0.0
  %976 = vmatpush2.msra.mxu0 0.0
  %977 = vmatprep.subr.mxu0 0.0
  %978 = vmatpush2.msra.mxu0 0.0
  %979 = vmatprep.subr.mxu0 0.0
  %980 = vmatpush2.msra.mxu0 0.0
  %981 = vmatprep.subr.mxu0 0.0
  %982 = vmatpush2.msra.mxu0 0.0
  %983 = vmatprep.subr.mxu0 0.0
  %984 = vmatpush2.msra.mxu0 0.0
  %985 = vmatprep.subr.mxu0 0.0
  %986 = vmatpush2.msra.mxu0 0.0
  %987 = vmatprep.subr.mxu0 0.0
  %988 = vmatpush2.msra.mxu0 0.0
  %989 = vmatprep.subr.mxu0 0.0
  %990 = vmatpush2.msra.mxu0 0.0
  %991 = vmatprep.mubr.f32.mxu0 0.0
  %992 = vmatmul.mubr.f32.gmra.mxu0 %v925
  %v993 = vpop.f32.mrf.mxu0
  %v994 = vadd.f32 %v920, %v993
  %v995 = vpop.f32.mrf.mxu0
  %996 = vdwg.mxu0
  %vm997 = vcmask 39936
  %998 = vst.msk [vmem:[%s6] sm:$0xff] %vm997, %v994
  // Predicated region
  $region26: #{timeseries_forward.1} parent=0 // pred_check
    _
  $region27: #{timeseries_forward.1} parent=0 // pred_check_branch
    %1000 = sbr.rel (0) target = $region29
  $region28: #{timeseries_forward.1} parent=0 // pred_region
    _
  $region29: #{timeseries_forward.1} parent=0 // pred_fallthru
    _
  // Predicated region
  $region30: #{timeseries_forward.1} parent=0 // pred_check
    _
  $region31: #{timeseries_forward.1} parent=0 // pred_check_branch
    %1002 = sbr.rel (0) target = $region33
  $region32: #{timeseries_forward.1} parent=0 // pred_region
    _
  $region33: #{timeseries_forward.1} parent=0 // pred_fallthru
    _

</llo_original>
